<compile_context>
chip_gen: v7x
topology: tpu7x:2x2x1
jax: 0.10.0
libtpu: 0.0.40
codegen_flags: <defaults>
</compile_context>

<pallas_src>
import functools

import jax
import jax.numpy as jnp
from jax.experimental import pallas as pl
from jax.experimental.pallas import tpu as pltpu


def _vq_argmin_kernel(x_ref, e_ref, hesq_ref, idx_ref,
                      best_d_ref, best_idx_ref, *, te):
    """One (row-tile, codebook-tile) block of the vector-quantizer argmin.

    x_ref    : (TN, D)  query vectors (f32 or bf16)
    e_ref    : (TE, D)  codebook slice (same dtype as x_ref)
    hesq_ref : (1, TE)  precomputed 0.5*||e||^2 (f32; padded rows = 1e30)
    idx_ref  : (TN, 1)  output: argmin indices (resident across codebook axis)
    best_d_ref  : (TN, 1) scratch: running best score
    best_idx_ref: (TN, 1) scratch: running best index
    """
    j = pl.program_id(1)

    # One MXU matmul per block: contraction over the full e_dim, f32 accumulate.
    xe = jax.lax.dot_general(
        x_ref[...], e_ref[...], (((1,), (1,)), ((), ())),
        preferred_element_type=jnp.float32)              # (TN, TE)

    # argmin-equivalent score: 0.5*||e||^2 - x.e  (||x||^2 and the *2 dropped).
    d = hesq_ref[...] - xe                               # (TN, TE)

    # argmin over this codebook tile: min + masked iota (first occurrence).
    # NOTE: the equality compare must use the exact same tensor as the min.
    local_min = jnp.min(d, axis=1, keepdims=True)                    # (TN, 1)
    iota = jax.lax.broadcasted_iota(jnp.int32, d.shape, 1)           # (TN, TE)
    local_arg = jnp.min(jnp.where(d == local_min, iota, te),
                        axis=1, keepdims=True)                       # (TN, 1)
    global_arg = local_arg + j * te                                  # (TN, 1)

    @pl.when(j == 0)
    def _():
        best_d_ref[...] = local_min
        best_idx_ref[...] = global_arg

    @pl.when(j > 0)
    def _():
        take = local_min < best_d_ref[...]   # strict -> first occurrence wins
        best_d_ref[...] = jnp.where(take, local_min, best_d_ref[...])
        best_idx_ref[...] = jnp.where(take, global_arg, best_idx_ref[...])

    # Touch the output ref exactly once per row tile.
    @pl.when(j == pl.num_programs(1) - 1)
    def _():
        idx_ref[...] = best_idx_ref[...]


def prepare_codebook(emb, *, te=256):
    """One-time codebook prep (cacheable across calls: emb is a fixed param).

    Returns (padded codebook (Ep, D) f32, half squared norms (1, Ep) f32).
    Padded rows get a +1e30 sentinel half-norm so they can never win.
    """
    n_e, _ = emb.shape
    e_pad = (-n_e) % te
    emb32 = emb.astype(jnp.float32)
    ep = jnp.pad(emb32, ((0, e_pad), (0, 0)))
    hesq = 0.5 * jnp.sum(emb32 * emb32, axis=1)
    hesq = jnp.pad(hesq, (0, e_pad), constant_values=1e30)
    return ep, hesq.reshape(1, n_e + e_pad)


def _pick_row_tile(n_rows):
    # Largest row tile for codebook reuse, but keep >= 2 row tiles so both
    # v7x TensorCores (the "parallel" row axis) have work when N is small.
    for tn in (512, 256, 128):
        if n_rows >= 2 * tn:
            return tn
    return 128


def quantizer_forward(x, emb, *, prepared=None, tn=None, te=256, use_bf16=False):
    """Pallas forward of Quantizer_module.

    x:   (N, e_dim) float32
    emb: (n_e, e_dim) float32  (embedding.weight)
    prepared: optional cached result of prepare_codebook(emb, te=te)
    use_bf16: cast the distance matmul inputs to bf16 (v6e/v7x MXU fill);
              elementwise math and norms stay f32.
    returns (z_q (N, e_dim) float32, min_indices (N,) int32)
    """
    N, D = x.shape
    n_e, D2 = emb.shape
    assert D == D2

    if tn is None:
        tn = _pick_row_tile(N)
    if prepared is None:
        prepared = prepare_codebook(emb, te=te)
    ep, hesq = prepared
    Ep = ep.shape[0]

    n_pad = (-N) % tn
    Np = N + n_pad
    xp = jnp.pad(x.astype(jnp.float32), ((0, n_pad), (0, 0)))

    mm_dtype = jnp.bfloat16 if use_bf16 else jnp.float32
    xp_mm = xp.astype(mm_dtype)
    ep_mm = ep.astype(mm_dtype)

    grid = (Np // tn, Ep // te)   # codebook (reduction) axis last

    idx = pl.pallas_call(
        functools.partial(_vq_argmin_kernel, te=te),
        out_shape=jax.ShapeDtypeStruct((Np, 1), jnp.int32),
        grid=grid,
        in_specs=[
            pl.BlockSpec((tn, D), lambda i, j: (i, 0)),
            # If an xprof trace still shows exposed DMA on the codebook stream
            # (v5e), add pipeline_mode=pl.Buffered(3) here.
            pl.BlockSpec((te, D), lambda i, j: (j, 0)),
            pl.BlockSpec((1, te), lambda i, j: (0, j)),
        ],
        out_specs=pl.BlockSpec((tn, 1), lambda i, j: (i, 0)),  # resident over j
        scratch_shapes=[pltpu.VMEM((tn, 1), jnp.float32),
                        pltpu.VMEM((tn, 1), jnp.int32)],
        compiler_params=pltpu.CompilerParams(
            dimension_semantics=("parallel", "arbitrary")),
    )(xp_mm, ep_mm, hesq)

    idx = idx[:N, 0]
    # Deferred gather outside the kernel: N*D*4 bytes, negligible vs the sweep,
    # and bit-exactly equal to embedding(idx).
    z_q = jnp.take(emb.astype(jnp.float32), idx, axis=0)
    return z_q, idx


# ----------------------------- pure-JAX reference -----------------------------
def reference_forward(x, emb):
    d = (jnp.sum(x * x, axis=1, keepdims=True)
         + jnp.sum(emb * emb, axis=1)
         - 2.0 * jnp.matmul(x, emb.T, precision=jax.lax.Precision.HIGHEST))
    idx = jnp.argmin(d, axis=1)
    zq = emb[idx]
    return zq, idx, d


if __name__ == "__main__":
    key = jax.random.PRNGKey(0)
    kx, ke = jax.random.split(key)

    # Small shapes consistent with the module; intentionally not tile-aligned.
    N, n_e, e_dim = 200, 320, 128
    x = jax.random.normal(kx, (N, e_dim), dtype=jnp.float32)
    emb = jax.random.uniform(ke, (n_e, e_dim),
                             minval=-1.0 / n_e, maxval=1.0 / n_e,
                             dtype=jnp.float32)   # matches nn.Embedding init

    prepared = prepare_codebook(emb)              # hoisted, cacheable
    zq, idx = quantizer_forward(x, emb, prepared=prepared)
    zq = jax.block_until_ready(zq)
    idx = jax.block_until_ready(idx)

    ref_zq, ref_idx, ref_d = reference_forward(x, emb)

    assert zq.shape == (N, e_dim) and idx.shape == (N,)
    # z_q must be exactly the embedding rows at the kernel's chosen indices.
    assert jnp.array_equal(zq, emb[idx]), "z_q != emb[idx]"

    flips = idx != ref_idx
    if bool(flips.any()):
        # Only acceptable when the two candidates are numerical ties in distance.
        rows = jnp.arange(N)
        gap = jnp.abs(ref_d[rows, idx] - ref_d[rows, ref_idx])
        assert float(jnp.max(jnp.where(flips, gap, 0.0))) < 1e-4, \
            "argmin mismatch beyond tie tolerance"
    else:
        assert jnp.allclose(zq, ref_zq, rtol=1e-5, atol=1e-7)

    print("KERNEL_OK")
</pallas_src>

<mosaic_0001>
module attributes {stable_mosaic.version = 11 : i64} {
  func.func @_vq_argmin_kernel(%arg0: i32, %arg1: i32, %arg2: memref<128x128xf32, #tpu.memory_space<vmem>>, %arg3: memref<256x128xf32, #tpu.memory_space<vmem>>, %arg4: memref<1x256xf32, #tpu.memory_space<vmem>>, %arg5: memref<128x1xi32, #tpu.memory_space<vmem>>, %arg6: memref<128x1xf32, #tpu.memory_space<vmem>>, %arg7: memref<128x1xi32, #tpu.memory_space<vmem>>) attributes {dimension_semantics = [#tpu.dimension_semantics<parallel>, #tpu.dimension_semantics<arbitrary>], iteration_bounds = array<i64: 2, 2>, scalar_prefetch = 0 : i64, scratch_operands = 2 : i64, tpu.core_type = #tpu.core_type<tc>, window_params = [{transform_indices = @transform_0, window_bounds = array<i64: 128, 128>}, {transform_indices = @transform_1, window_bounds = array<i64: 256, 128>}, {transform_indices = @transform_2, window_bounds = array<i64: 1, 256>}, {transform_indices = @transform_3, window_bounds = array<i64: 128, 1>}]} {
    %c0 = arith.constant 0 : index
    %c0_0 = arith.constant 0 : index
    %0 = vector.load %arg2[%c0, %c0_0] : memref<128x128xf32, #tpu.memory_space<vmem>>, vector<128x128xf32>
    %c0_1 = arith.constant 0 : index
    %c0_2 = arith.constant 0 : index
    %1 = vector.load %arg3[%c0_1, %c0_2] : memref<256x128xf32, #tpu.memory_space<vmem>>, vector<256x128xf32>
    %cst = arith.constant dense<0.000000e+00> : vector<128x256xf32>
    %2 = tpu.matmul %0, %1, %cst {dimension_numbers = #tpu.dot_dimension_numbers<[1], [1], [0], [0], [0, 0, 1, 0], [], []>} : vector<128x128xf32>, vector<256x128xf32>, vector<128x256xf32> -> vector<128x256xf32>
    %c0_3 = arith.constant 0 : index
    %c0_4 = arith.constant 0 : index
    %3 = vector.load %arg4[%c0_3, %c0_4] : memref<1x256xf32, #tpu.memory_space<vmem>>, vector<1x256xf32>
    %4 = vector.broadcast %3 : vector<1x256xf32> to vector<128x256xf32>
    %5 = arith.subf %4, %2 : vector<128x256xf32>
    %cst_5 = arith.constant dense<0x7F800000> : vector<128xf32>
    %6 = vector.multi_reduction <minimumf>, %5, %cst_5 [1] : vector<128x256xf32> to vector<128xf32>
    %7 = vector.shape_cast %6 : vector<128xf32> to vector<128x1xf32>
    %8 = tpu.iota {dimensions = array<i32: 1>} : vector<128x256xi32>
    %9 = vector.broadcast %7 : vector<128x1xf32> to vector<128x256xf32>
    %10 = arith.cmpf oeq, %5, %9 : vector<128x256xf32>
    %c256_i32 = arith.constant 256 : i32
    %11 = vector.broadcast %c256_i32 : i32 to vector<128x256xi32>
    %12 = arith.select %10, %8, %11 : vector<128x256xi1>, vector<128x256xi32>
    %cst_6 = arith.constant dense<2147483647> : vector<128xi32>
    %13 = vector.multi_reduction <minsi>, %12, %cst_6 [1] : vector<128x256xi32> to vector<128xi32>
    %14 = vector.shape_cast %13 : vector<128xi32> to vector<128x1xi32>
    %c256_i32_7 = arith.constant 256 : i32
    %15 = arith.muli %arg1, %c256_i32_7 : i32
    %16 = vector.broadcast %15 : i32 to vector<128x1xi32>
    %17 = arith.addi %14, %16 : vector<128x1xi32>
    %c0_i32 = arith.constant 0 : i32
    %18 = arith.cmpi eq, %arg1, %c0_i32 : i32
    %19 = arith.extui %18 : i1 to i32
    %c0_i32_8 = arith.constant 0 : i32
    %20 = arith.cmpi ne, %19, %c0_i32_8 : i32
    scf.if %20 {
      %c0_12 = arith.constant 0 : index
      %c0_13 = arith.constant 0 : index
      %27 = vector.load %arg6[%c0_12, %c0_13] : memref<128x1xf32, #tpu.memory_space<vmem>>, vector<128x1xf32>
      tpu.vector_store %arg6[%c0_12, %c0_13], %7 {strides = array<i32>} : memref<128x1xf32, #tpu.memory_space<vmem>>, vector<128x1xf32>,
      %c0_14 = arith.constant 0 : index
      %c0_15 = arith.constant 0 : index
      %28 = vector.load %arg7[%c0_14, %c0_15] : memref<128x1xi32, #tpu.memory_space<vmem>>, vector<128x1xi32>
      tpu.vector_store %arg7[%c0_14, %c0_15], %17 {strides = array<i32>} : memref<128x1xi32, #tpu.memory_space<vmem>>, vector<128x1xi32>,
    } else {
    }
    %c0_i32_9 = arith.constant 0 : i32
    %21 = arith.cmpi sgt, %arg1, %c0_i32_9 : i32
    %22 = arith.extui %21 : i1 to i32
    %c0_i32_10 = arith.constant 0 : i32
    %23 = arith.cmpi ne, %22, %c0_i32_10 : i32
    scf.if %23 {
      %c0_12 = arith.constant 0 : index
      %c0_13 = arith.constant 0 : index
      %27 = vector.load %arg6[%c0_12, %c0_13] : memref<128x1xf32, #tpu.memory_space<vmem>>, vector<128x1xf32>
      %28 = arith.cmpf olt, %7, %27 : vector<128x1xf32>
      %c0_14 = arith.constant 0 : index
      %c0_15 = arith.constant 0 : index
      %29 = vector.load %arg6[%c0_14, %c0_15] : memref<128x1xf32, #tpu.memory_space<vmem>>, vector<128x1xf32>
      %30 = arith.select %28, %7, %29 : vector<128x1xi1>, vector<128x1xf32>
      %c0_16 = arith.constant 0 : index
      %c0_17 = arith.constant 0 : index
      %31 = vector.load %arg6[%c0_16, %c0_17] : memref<128x1xf32, #tpu.memory_space<vmem>>, vector<128x1xf32>
      tpu.vector_store %arg6[%c0_16, %c0_17], %30 {strides = array<i32>} : memref<128x1xf32, #tpu.memory_space<vmem>>, vector<128x1xf32>,
      %c0_18 = arith.constant 0 : index
      %c0_19 = arith.constant 0 : index
      %32 = vector.load %arg7[%c0_18, %c0_19] : memref<128x1xi32, #tpu.memory_space<vmem>>, vector<128x1xi32>
      %33 = arith.select %28, %17, %32 : vector<128x1xi1>, vector<128x1xi32>
      %c0_20 = arith.constant 0 : index
      %c0_21 = arith.constant 0 : index
      %34 = vector.load %arg7[%c0_20, %c0_21] : memref<128x1xi32, #tpu.memory_space<vmem>>, vector<128x1xi32>
      tpu.vector_store %arg7[%c0_20, %c0_21], %33 {strides = array<i32>} : memref<128x1xi32, #tpu.memory_space<vmem>>, vector<128x1xi32>,
    } else {
    }
    %c1_i32 = arith.constant 1 : i32
    %24 = arith.cmpi eq, %arg1, %c1_i32 : i32
    %25 = arith.extui %24 : i1 to i32
    %c0_i32_11 = arith.constant 0 : i32
    %26 = arith.cmpi ne, %25, %c0_i32_11 : i32
    scf.if %26 {
      %c0_12 = arith.constant 0 : index
      %c0_13 = arith.constant 0 : index
      %27 = vector.load %arg7[%c0_12, %c0_13] : memref<128x1xi32, #tpu.memory_space<vmem>>, vector<128x1xi32>
      %c0_14 = arith.constant 0 : index
      %c0_15 = arith.constant 0 : index
      %28 = vector.load %arg5[%c0_14, %c0_15] : memref<128x1xi32, #tpu.memory_space<vmem>>, vector<128x1xi32>
      tpu.vector_store %arg5[%c0_14, %c0_15], %27 {strides = array<i32>} : memref<128x1xi32, #tpu.memory_space<vmem>>, vector<128x1xi32>,
    } else {
    }
    return
  }
  func.func @transform_0(%arg0: i32, %arg1: i32) -> (i32, i32) {
    %c0_i32 = arith.constant 0 : i32
    %c0_i32_0 = arith.constant 0 : i32
    return %arg0, %c0_i32 : i32, i32
  }
  func.func @transform_1(%arg0: i32, %arg1: i32) -> (i32, i32) {
    %c0_i32 = arith.constant 0 : i32
    %c0_i32_0 = arith.constant 0 : i32
    return %arg1, %c0_i32 : i32, i32
  }
  func.func @transform_2(%arg0: i32, %arg1: i32) -> (i32, i32) {
    %c0_i32 = arith.constant 0 : i32
    %c0_i32_0 = arith.constant 0 : i32
    return %c0_i32, %arg1 : i32, i32
  }
  func.func @transform_3(%arg0: i32, %arg1: i32) -> (i32, i32) {
    %c0_i32 = arith.constant 0 : i32
    %c0_i32_0 = arith.constant 0 : i32
    return %arg0, %c0_i32 : i32, i32
  }
}

</mosaic_0001>

<llo_original>
// kernel: tpu_custom_call.1
$region0: #{tpu_custom_call.1}
  #allocation0 [shape = 'u32[]', space=smem, size = 0x4, offset = 0x4, fixed_abs, tag = 'smem constant byte address 0x4 - core index']
  #allocation1 [shape = 'u32[144,128]{1,0:T(1,128)}', space=vmem, size = 0x12000, scoped, tag = 'internal scratch']
  #allocation2 [shape = 'f32[128,1]{1,0:T(8,128)}', space=vmem, size = 0x10000, scoped, tag = 'scratch operand']
  #allocation3 [shape = 's32[128,1]{1,0:T(8,128)}', space=vmem, size = 0x10000, scoped, tag = 'scratch operand']
  %s0 = inlined_call_operand.hbm [shape: f32[256,128], index: 0, kind: input, shape index: {}]
  %s1 = inlined_call_operand.hbm [shape: f32[512,128], index: 1, kind: input, shape index: {}]
  %s2 = inlined_call_operand.vmem [shape: f32[1,512], index: 2, kind: input, shape index: {}]
  %s3 = inlined_call_operand.vmem [shape: s32[256,1], index: 3, kind: output, shape index: {}]
  %s4 = sld [smem:[#allocation0]]
  $region65: #{tpu_custom_call.1} parent=0
    _
  %s6 = ssub.s32 1, %s4
  %s7 = scalar_select 0, %s6, %s4
  $region1: #{tpu_custom_call.1} parent=0
    #allocation4 [shape = 'u8[131072]{0}', space=vmem, size = 0x20000, scoped, tag = 'input window, operand 0']
    #allocation5 [shape = 's32[2]{0}', space=sflag, size = 0x8, scoped, tag = 'scoped memory for tpu_custom_call.1']
    #allocation6 [shape = 'u8[262144]{0}', space=vmem, size = 0x40000, scoped, tag = 'input window, operand 1']
    #allocation7 [shape = 's32[2]{0}', space=sflag, size = 0x8, scoped, tag = 'scoped memory for tpu_custom_call.1']
    %8 = vsyncpa [#allocation5], 0
    %s9 = scalar_lea.sflag [#allocation5], 1
    %10 = vsyncpa %s9, 0
    %11 = vsyncpa [#allocation7], 0
    %s12 = scalar_lea.sflag [#allocation7], 1
    %13 = vsyncpa %s12, 0
    loop: start=0, step=1, limit=6
    $region2: #{tpu_custom_call.1} parent=1 // loop_pre_header
      _
    $region3: #{tpu_custom_call.1} parent=1 // loop_header
      %s15 = sphi 0, %s19
      %p16 = scmp.ge.s32.totalorder %s15, 6
      %s22 = sphi 0, %s34
      %s23 = sphi 0, %s30
      %s24 = sphi 0, %s22
      %s25 = sphi 0, %s23
      %s26 = sphi 0, %s24
      %s27 = sphi 0, %s25
      %s37 = sphi 0, %s39
      %s40 = sphi 0, %s37
      %s41 = sphi 0, %s40
      %s57 = sphi 0, %s41
      %s63 = sphi 0, %s65
      %s66 = sphi 0, %s63
      %s67 = sphi 0, %s66
      %s83 = sphi 0, %s67
      %s89 = sphi 0, %s91
      %s92 = sphi 0, %s89
      %s93 = sphi 0, %s92
      %s109 = sphi 0, %s93
      %s115 = sphi 0, %s117
      %s118 = sphi 0, %s115
      %s119 = sphi 0, %s118
      %s135 = sphi 0, %s119
    $region4: #{tpu_custom_call.1} parent=1 // loop_header_branch
      %18 = sbr.rel (%p16) target = $region8
    $region5: #{tpu_custom_call.1} parent=1 // loop_body
      %s20 = ssub.s32 %s15, 1
      %s21 = ssub.s32 %s15, 2
      %s28 = sadd.s32 1, %s23
      %p29 = scmp.ge.s32.totalorder %s28, 2
      %s30 = scalar_select %p29, 0, %s28
      %s31 = sadd.s32 1, %s22
      %s32 = scalar_select %p29, %s31, %s22
      %p33 = scmp.ge.s32.totalorder %s32, 2
      %s34 = scalar_select %p33, 0, %s32
      %s35 = ssub.s32 %s22, %s34
      %p36 = scmp.eq.s32.totalorder %s35, 0
      %s38 = sadd.s32 %s37, 1
      %s39 = scalar_select %p36, %s37, %s38
      %p42 = pneg %p36
      %p43 = scmp.eq.s32.totalorder %s15, 3
      %p44 = por %p42, %p43
      %p45 = scmp.ne.s32.totalorder %s37, %s40
      %p46 = scmp.eq.s32.totalorder %s15, 0
      %p47 = por %p45, %p46
      %p48 = scmp.ne.s32.totalorder %s37, %s40
      %p49 = scmp.eq.s32.totalorder %s20, 3
      %p50 = por %p48, %p49
      %p51 = scmp.ne.s32.totalorder %s40, %s41
      %p52 = scmp.eq.s32.totalorder %s20, 0
      %p53 = por %p51, %p52
      %p54 = scmp.ne.s32.totalorder %s40, %s41
      %p55 = scmp.eq.s32.totalorder %s21, 3
      %p56 = por %p54, %p55
      %p58 = scmp.ne.s32.totalorder %s41, %s57
      %p59 = scmp.eq.s32.totalorder %s21, 0
      %p60 = por %p58, %p59
      %s61 = ssub.s32 %s23, %s30
      %p62 = scmp.eq.s32.totalorder %s61, 0
      %s64 = sadd.s32 %s63, 1
      %s65 = scalar_select %p62, %s63, %s64
      %p68 = pneg %p62
      %p69 = scmp.eq.s32.totalorder %s15, 3
      %p70 = por %p68, %p69
      %p71 = scmp.ne.s32.totalorder %s63, %s66
      %p72 = scmp.eq.s32.totalorder %s15, 0
      %p73 = por %p71, %p72
      %p74 = scmp.ne.s32.totalorder %s63, %s66
      %p75 = scmp.eq.s32.totalorder %s20, 3
      %p76 = por %p74, %p75
      %p77 = scmp.ne.s32.totalorder %s66, %s67
      %p78 = scmp.eq.s32.totalorder %s20, 0
      %p79 = por %p77, %p78
      %p80 = scmp.ne.s32.totalorder %s66, %s67
      %p81 = scmp.eq.s32.totalorder %s21, 3
      %p82 = por %p80, %p81
      %p84 = scmp.ne.s32.totalorder %s67, %s83
      %p85 = scmp.eq.s32.totalorder %s21, 0
      %p86 = por %p84, %p85
      %s87 = ssub.s32 %s23, %s30
      %p88 = scmp.eq.s32.totalorder %s87, 0
      %s90 = sadd.s32 %s89, 1
      %s91 = scalar_select %p88, %s89, %s90
      %p94 = pneg %p88
      %p95 = scmp.eq.s32.totalorder %s15, 3
      %p96 = por %p94, %p95
      %p97 = scmp.ne.s32.totalorder %s89, %s92
      %p98 = scmp.eq.s32.totalorder %s15, 0
      %p99 = por %p97, %p98
      %p100 = scmp.ne.s32.totalorder %s89, %s92
      %p101 = scmp.eq.s32.totalorder %s20, 3
      %p102 = por %p100, %p101
      %p103 = scmp.ne.s32.totalorder %s92, %s93
      %p104 = scmp.eq.s32.totalorder %s20, 0
      %p105 = por %p103, %p104
      %p106 = scmp.ne.s32.totalorder %s92, %s93
      %p107 = scmp.eq.s32.totalorder %s21, 3
      %p108 = por %p106, %p107
      %p110 = scmp.ne.s32.totalorder %s93, %s109
      %p111 = scmp.eq.s32.totalorder %s21, 0
      %p112 = por %p110, %p111
      %s113 = ssub.s32 %s22, %s34
      %p114 = scmp.eq.s32.totalorder %s113, 0
      %s116 = sadd.s32 %s115, 1
      %s117 = scalar_select %p114, %s115, %s116
      %p120 = pneg %p114
      %p121 = scmp.eq.s32.totalorder %s15, 3
      %p122 = por %p120, %p121
      %p123 = scmp.ne.s32.totalorder %s115, %s118
      %p124 = scmp.eq.s32.totalorder %s15, 0
      %p125 = por %p123, %p124
      %p126 = scmp.ne.s32.totalorder %s115, %s118
      %p127 = scmp.eq.s32.totalorder %s20, 3
      %p128 = por %p126, %p127
      %p129 = scmp.ne.s32.totalorder %s118, %s119
      %p130 = scmp.eq.s32.totalorder %s20, 0
      %p131 = por %p129, %p130
      %p132 = scmp.ne.s32.totalorder %s118, %s119
      %p133 = scmp.eq.s32.totalorder %s21, 3
      %p134 = por %p132, %p133
      %p136 = scmp.ne.s32.totalorder %s119, %s135
      %p137 = scmp.eq.s32.totalorder %s21, 0
      %p138 = por %p136, %p137
      %p139 = scmp.le.s32.totalorder 1, %s15
      %p140 = scmp.lt.s32.totalorder %s15, 5
      %p141 = pnand %p139, %p140
      %p142 = pneg %p141
      // Predicated region
      $region9: #{tpu_custom_call.1} parent=5 // pred_check
        _
      $region10: #{tpu_custom_call.1} parent=5 // pred_check_branch
        %144 = sbr.rel (%p141) target = $region12
      $region11: #{tpu_custom_call.1} parent=5 // pred_region
        %s145 = ssub.s32 %s15, 1
      $region12: #{tpu_custom_call.1} parent=5 // pred_fallthru
        _
      %p146 = scmp.lt.s32.totalorder %s15, 4
      // Predicated region
      $region13: #{tpu_custom_call.1} parent=5 // pred_check
        %p147 = pneg %p146
      $region14: #{tpu_custom_call.1} parent=5 // pred_check_branch
        %149 = sbr.rel (%p147) target = $region16
      $region15: #{tpu_custom_call.1} parent=5 // pred_region
        // Predicated region
        $region17: #{tpu_custom_call.1} parent=15 // pred_check
          %p150 = pneg %p47
        $region18: #{tpu_custom_call.1} parent=15 // pred_check_branch
          %152 = sbr.rel (%p150) target = $region20
        $region19: #{tpu_custom_call.1} parent=15 // pred_region
          %s153 = sand.u32 %s37, 1
          %s154 = scalar_lea.sflag [#allocation5], %s153
          %s155 = sand.u32 %s37, 1
          %s156 = smul.addr %s155, 128
          %s157 = scalar_lea.vmem [#allocation4], %s156
          %s158 = smul.u32 16, %s22
          %s160 = ssub.s32 2048, 2048
          %161 = vsyncadd %s154, %s160
          %s162 = smul.addr %s158, 128
          %s163 = scalar_lea.hbm %s0, %s162
          %s164 = sshll.u32 %s157, 4
          %s165 = int_to_ptr.vmem [resolvable:$true] %s164
          %170 = dma.hbm_to_vmem [thread:$0]  %s163, 2048, %s165, %s154, 128, 128, 8
        $region20: #{tpu_custom_call.1} parent=15 // pred_fallthru
          _
        // Predicated region
        $region21: #{tpu_custom_call.1} parent=15 // pred_check
          %p171 = pneg %p73
        $region22: #{tpu_custom_call.1} parent=15 // pred_check_branch
          %173 = sbr.rel (%p171) target = $region24
        $region23: #{tpu_custom_call.1} parent=15 // pred_region
          %s174 = sand.u32 %s63, 1
          %s175 = scalar_lea.sflag [#allocation7], %s174
          %s176 = sand.u32 %s63, 1
          %s177 = smul.addr %s176, 256
          %s178 = scalar_lea.vmem [#allocation6], %s177
          %s179 = smul.u32 32, %s23
          %s181 = ssub.s32 4096, 4096
          %182 = vsyncadd %s175, %s181
          %s183 = smul.addr %s179, 128
          %s184 = scalar_lea.hbm %s1, %s183
          %s185 = sshll.u32 %s178, 4
          %s186 = int_to_ptr.vmem [resolvable:$true] %s185
          %191 = dma.hbm_to_vmem [thread:$0]  %s184, 4096, %s186, %s175, 128, 128, 8
        $region24: #{tpu_custom_call.1} parent=15 // pred_fallthru
          _
        // Predicated region
        $region25: #{tpu_custom_call.1} parent=15 // pred_check
          %p192 = pneg %p99
        $region26: #{tpu_custom_call.1} parent=15 // pred_check_branch
          %194 = sbr.rel (%p192) target = $region28
        $region27: #{tpu_custom_call.1} parent=15 // pred_region
          %s195 = smul.u32 2, %s23
          %p196 = scmp.lt.s32.totalorder %s195, 3
          %s197 = scalar_select %p196, %s195, 3
          %s198 = scalar_lea.vmem %s2, %s197
          %s199 = smul.u32 2, %s23
        $region28: #{tpu_custom_call.1} parent=15 // pred_fallthru
          _
      $region16: #{tpu_custom_call.1} parent=5 // pred_fallthru
        _
      %p200 = scmp.le.s32.totalorder 1, %s15
      %p201 = scmp.lt.s32.totalorder %s15, 5
      %p202 = pnand %p200, %p201
      %p203 = pneg %p202
      // Predicated region
      $region29: #{tpu_custom_call.1} parent=5 // pred_check
        _
      $region30: #{tpu_custom_call.1} parent=5 // pred_check_branch
        %205 = sbr.rel (%p202) target = $region32
      $region31: #{tpu_custom_call.1} parent=5 // pred_region
        %s206 = ssub.s32 %s15, 1
        %s207 = sand.u32 %s40, 1
        %s208 = scalar_lea.sflag [#allocation5], %s207
        %s209 = sand.u32 %s40, 1
        %s210 = smul.addr %s209, 128
        %s211 = scalar_lea.vmem [#allocation4], %s210
        // Predicated region
        $region33: #{tpu_custom_call.1} parent=31 // pred_check
          %p212 = pneg %p53
        $region34: #{tpu_custom_call.1} parent=31 // pred_check_branch
          %214 = sbr.rel (%p212) target = $region36
        $region35: #{tpu_custom_call.1} parent=31 // pred_region
          %215 = dma.done %s208, 2048
        $region36: #{tpu_custom_call.1} parent=31 // pred_fallthru
          _
        %s216 = sand.u32 %s66, 1
        %s217 = scalar_lea.sflag [#allocation7], %s216
        %s218 = sand.u32 %s66, 1
        %s219 = smul.addr %s218, 256
        %s220 = scalar_lea.vmem [#allocation6], %s219
        // Predicated region
        $region37: #{tpu_custom_call.1} parent=31 // pred_check
          %p221 = pneg %p79
        $region38: #{tpu_custom_call.1} parent=31 // pred_check_branch
          %223 = sbr.rel (%p221) target = $region40
        $region39: #{tpu_custom_call.1} parent=31 // pred_region
          %224 = dma.done %s217, 4096
        $region40: #{tpu_custom_call.1} parent=31 // pred_fallthru
          _
        %s225 = sand.u32 %s40, 1
        %s226 = scalar_lea.sflag [#allocation5], %s225
        %s227 = sand.u32 %s40, 1
        %s228 = smul.addr %s227, 128
        %s229 = scalar_lea.vmem [#allocation4], %s228
        %p230 = pneg %p53
        %p231 = pneg %p50
        %s232 = sand.u32 %s66, 1
        %s233 = scalar_lea.sflag [#allocation7], %s232
        %s234 = sand.u32 %s66, 1
        %s235 = smul.addr %s234, 256
        %s236 = scalar_lea.vmem [#allocation6], %s235
        %p237 = pneg %p79
        %p238 = pneg %p76
        %s239 = smul.u32 2, %s25
        %p240 = scmp.lt.s32.totalorder %s239, 3
        %s241 = scalar_select %p240, %s239, 3
        %s242 = scalar_lea.vmem %s2, %s241
        %p243 = pneg %p105
        %p244 = pneg %p102
        %p245 = pneg %p131
        %p246 = pneg %p128
        %s247 = smul.u32 16, %s24
        %p248 = scmp.lt.s32.totalorder %s247, 31
        %s249 = scalar_select %p248, %s247, 31
        %s250 = smul.addr %s249, 8
        %s251 = scalar_lea.vmem %s3, %s250
        %s252 = smul.u32 16, %s24
        %s253 = smul.u32 32, %s25
        %s254 = smul.u32 2, %s25
        %p255 = scmp.lt.s32.totalorder %s254, 3
        %s256 = scalar_select %p255, %s254, 3
        %s257 = scalar_lea.vmem %s2, %s256
        %s258 = smul.u32 2, %s25
        %s259 = smul.u32 16, %s24
        %p260 = scmp.lt.s32.totalorder %s259, 31
        %s261 = scalar_select %p260, %s259, 31
        %s262 = smul.addr %s261, 8
        %s263 = scalar_lea.vmem %s3, %s262
        %s264 = smul.u32 16, %s24
        %v265 = vld [vmem:[%s211] sm:$0xff]
        %v266 = vld [vmem:[%s211 + $0x8] sm:$0xff]
        %v267 = vld [vmem:[%s211 + $0x10] sm:$0xff]
        %v268 = vld [vmem:[%s211 + $0x18] sm:$0xff]
        %v269 = vld [vmem:[%s211 + $0x20] sm:$0xff]
        %v270 = vld [vmem:[%s211 + $0x28] sm:$0xff]
        %v271 = vld [vmem:[%s211 + $0x30] sm:$0xff]
        %v272 = vld [vmem:[%s211 + $0x38] sm:$0xff]
        %v273 = vld [vmem:[%s211 + $0x40] sm:$0xff]
        %v274 = vld [vmem:[%s211 + $0x48] sm:$0xff]
        %v275 = vld [vmem:[%s211 + $0x50] sm:$0xff]
        %v276 = vld [vmem:[%s211 + $0x58] sm:$0xff]
        %v277 = vld [vmem:[%s211 + $0x60] sm:$0xff]
        %v278 = vld [vmem:[%s211 + $0x68] sm:$0xff]
        %v279 = vld [vmem:[%s211 + $0x70] sm:$0xff]
        %v280 = vld [vmem:[%s211 + $0x78] sm:$0xff]
        %v281 = vld [vmem:[%s220] sm:$0xff]
        %v282 = vld [vmem:[%s220 + $0x8] sm:$0xff]
        %v283 = vld [vmem:[%s220 + $0x10] sm:$0xff]
        %v284 = vld [vmem:[%s220 + $0x18] sm:$0xff]
        %v285 = vld [vmem:[%s220 + $0x20] sm:$0xff]
        %v286 = vld [vmem:[%s220 + $0x28] sm:$0xff]
        %v287 = vld [vmem:[%s220 + $0x30] sm:$0xff]
        %v288 = vld [vmem:[%s220 + $0x38] sm:$0xff]
        %v289 = vld [vmem:[%s220 + $0x40] sm:$0xff]
        %v290 = vld [vmem:[%s220 + $0x48] sm:$0xff]
        %v291 = vld [vmem:[%s220 + $0x50] sm:$0xff]
        %v292 = vld [vmem:[%s220 + $0x58] sm:$0xff]
        %v293 = vld [vmem:[%s220 + $0x60] sm:$0xff]
        %v294 = vld [vmem:[%s220 + $0x68] sm:$0xff]
        %v295 = vld [vmem:[%s220 + $0x70] sm:$0xff]
        %v296 = vld [vmem:[%s220 + $0x78] sm:$0xff]
        %v297 = vld [vmem:[%s220 + $0x80] sm:$0xff]
        %v298 = vld [vmem:[%s220 + $0x88] sm:$0xff]
        %v299 = vld [vmem:[%s220 + $0x90] sm:$0xff]
        %v300 = vld [vmem:[%s220 + $0x98] sm:$0xff]
        %v301 = vld [vmem:[%s220 + $0xa0] sm:$0xff]
        %v302 = vld [vmem:[%s220 + $0xa8] sm:$0xff]
        %v303 = vld [vmem:[%s220 + $0xb0] sm:$0xff]
        %v304 = vld [vmem:[%s220 + $0xb8] sm:$0xff]
        %v305 = vld [vmem:[%s220 + $0xc0] sm:$0xff]
        %v306 = vld [vmem:[%s220 + $0xc8] sm:$0xff]
        %v307 = vld [vmem:[%s220 + $0xd0] sm:$0xff]
        %v308 = vld [vmem:[%s220 + $0xd8] sm:$0xff]
        %v309 = vld [vmem:[%s220 + $0xe0] sm:$0xff]
        %v310 = vld [vmem:[%s220 + $0xe8] sm:$0xff]
        %v311 = vld [vmem:[%s220 + $0xf0] sm:$0xff]
        %v312 = vld [vmem:[%s220 + $0xf8] sm:$0xff]
        %313 = vmatprep.subr.mxu0 0.0
        %314 = vmatpush1.xpose.msra.mxu0 %v281
        %315 = vmatprep.subr.mxu0 0.0
        %316 = vmatpush1.xpose.msra.mxu0 %v282
        %317 = vmatprep.subr.mxu0 0.0
        %318 = vmatpush1.xpose.msra.mxu0 %v283
        %319 = vmatprep.subr.mxu0 0.0
        %320 = vmatpush1.xpose.msra.mxu0 %v284
        %321 = vmatprep.subr.mxu0 0.0
        %322 = vmatpush1.xpose.msra.mxu0 %v285
        %323 = vmatprep.subr.mxu0 0.0
        %324 = vmatpush1.xpose.msra.mxu0 %v286
        %325 = vmatprep.subr.mxu0 0.0
        %326 = vmatpush1.xpose.msra.mxu0 %v287
        %327 = vmatprep.subr.mxu0 0.0
        %328 = vmatpush1.xpose.msra.mxu0 %v288
        %329 = vmatprep.subr.mxu0 0.0
        %330 = vmatpush1.xpose.msra.mxu0 %v289
        %331 = vmatprep.subr.mxu0 0.0
        %332 = vmatpush1.xpose.msra.mxu0 %v290
        %333 = vmatprep.subr.mxu0 0.0
        %334 = vmatpush1.xpose.msra.mxu0 %v291
        %335 = vmatprep.subr.mxu0 0.0
        %336 = vmatpush1.xpose.msra.mxu0 %v292
        %337 = vmatprep.subr.mxu0 0.0
        %338 = vmatpush1.xpose.msra.mxu0 %v293
        %339 = vmatprep.subr.mxu0 0.0
        %340 = vmatpush1.xpose.msra.mxu0 %v294
        %341 = vmatprep.subr.mxu0 0.0
        %342 = vmatpush1.xpose.msra.mxu0 %v295
        %343 = vmatprep.subr.mxu0 0.0
        %344 = vmatpush1.xpose.msra.mxu0 %v296
        %345 = vmatprep.subr.mxu0 0.0
        %346 = vmatpush1.xpose.msra.mxu0 %v297
        %347 = vmatprep.subr.mxu0 0.0
        %348 = vmatpush1.xpose.msra.mxu0 %v298
        %349 = vmatprep.subr.mxu0 0.0
        %350 = vmatpush1.xpose.msra.mxu0 %v299
        %351 = vmatprep.subr.mxu0 0.0
        %352 = vmatpush1.xpose.msra.mxu0 %v300
        %353 = vmatprep.subr.mxu0 0.0
        %354 = vmatpush1.xpose.msra.mxu0 %v301
        %355 = vmatprep.subr.mxu0 0.0
        %356 = vmatpush1.xpose.msra.mxu0 %v302
        %357 = vmatprep.subr.mxu0 0.0
        %358 = vmatpush1.xpose.msra.mxu0 %v303
        %359 = vmatprep.subr.mxu0 0.0
        %360 = vmatpush1.xpose.msra.mxu0 %v304
        %361 = vmatprep.subr.mxu0 0.0
        %362 = vmatpush1.xpose.msra.mxu0 %v305
        %363 = vmatprep.subr.mxu0 0.0
        %364 = vmatpush1.xpose.msra.mxu0 %v306
        %365 = vmatprep.subr.mxu0 0.0
        %366 = vmatpush1.xpose.msra.mxu0 %v307
        %367 = vmatprep.subr.mxu0 0.0
        %368 = vmatpush1.xpose.msra.mxu0 %v308
        %369 = vmatprep.subr.mxu0 0.0
        %370 = vmatpush1.xpose.msra.mxu0 %v309
        %371 = vmatprep.subr.mxu0 0.0
        %372 = vmatpush1.xpose.msra.mxu0 %v310
        %373 = vmatprep.subr.mxu0 0.0
        %374 = vmatpush1.xpose.msra.mxu0 %v311
        %375 = vmatprep.subr.mxu0 0.0
        %376 = vmatpush1.xpose.msra.mxu0 %v312
        %377 = vmatprep.mubr.f32.mxu0 0.0
        %378 = vmatmul.mubr.f32.gmra.mrb[0].mxu0 %v265
        %v379 = vpop.f32.mrb[0].mxu0
        %v380 = vadd.f32 0.0, %v379
        %v381 = vpop.f32.mrb[0].mxu0
        %v382 = vadd.f32 0.0, %v381
        %383 = vmatprep.mubr.f32.mxu0 0.0
        %384 = vmatmul.mubr.f32.gmra.mrb[0].mxu0 %v266
        %v385 = vpop.f32.mrb[0].mxu0
        %v386 = vadd.f32 0.0, %v385
        %v387 = vpop.f32.mrb[0].mxu0
        %v388 = vadd.f32 0.0, %v387
        %389 = vmatprep.mubr.f32.mxu0 0.0
        %390 = vmatmul.mubr.f32.gmra.mrb[0].mxu0 %v267
        %v391 = vpop.f32.mrb[0].mxu0
        %v392 = vadd.f32 0.0, %v391
        %v393 = vpop.f32.mrb[0].mxu0
        %v394 = vadd.f32 0.0, %v393
        %395 = vmatprep.mubr.f32.mxu0 0.0
        %396 = vmatmul.mubr.f32.gmra.mrb[0].mxu0 %v268
        %v397 = vpop.f32.mrb[0].mxu0
        %v398 = vadd.f32 0.0, %v397
        %v399 = vpop.f32.mrb[0].mxu0
        %v400 = vadd.f32 0.0, %v399
        %401 = vmatprep.mubr.f32.mxu0 0.0
        %402 = vmatmul.mubr.f32.gmra.mrb[0].mxu0 %v269
        %v403 = vpop.f32.mrb[0].mxu0
        %v404 = vadd.f32 0.0, %v403
        %v405 = vpop.f32.mrb[0].mxu0
        %v406 = vadd.f32 0.0, %v405
        %407 = vmatprep.mubr.f32.mxu0 0.0
        %408 = vmatmul.mubr.f32.gmra.mrb[0].mxu0 %v270
        %v409 = vpop.f32.mrb[0].mxu0
        %v410 = vadd.f32 0.0, %v409
        %v411 = vpop.f32.mrb[0].mxu0
        %v412 = vadd.f32 0.0, %v411
        %413 = vmatprep.mubr.f32.mxu0 0.0
        %414 = vmatmul.mubr.f32.gmra.mrb[0].mxu0 %v271
        %v415 = vpop.f32.mrb[0].mxu0
        %v416 = vadd.f32 0.0, %v415
        %v417 = vpop.f32.mrb[0].mxu0
        %v418 = vadd.f32 0.0, %v417
        %419 = vmatprep.mubr.f32.mxu0 0.0
        %420 = vmatmul.mubr.f32.gmra.mrb[0].mxu0 %v272
        %v421 = vpop.f32.mrb[0].mxu0
        %v422 = vadd.f32 0.0, %v421
        %v423 = vpop.f32.mrb[0].mxu0
        %v424 = vadd.f32 0.0, %v423
        %425 = vmatprep.mubr.f32.mxu0 0.0
        %426 = vmatmul.mubr.f32.gmra.mrb[0].mxu0 %v273
        %v427 = vpop.f32.mrb[0].mxu0
        %v428 = vadd.f32 0.0, %v427
        %v429 = vpop.f32.mrb[0].mxu0
        %v430 = vadd.f32 0.0, %v429
        %431 = vmatprep.mubr.f32.mxu0 0.0
        %432 = vmatmul.mubr.f32.gmra.mrb[0].mxu0 %v274
        %v433 = vpop.f32.mrb[0].mxu0
        %v434 = vadd.f32 0.0, %v433
        %v435 = vpop.f32.mrb[0].mxu0
        %v436 = vadd.f32 0.0, %v435
        %437 = vmatprep.mubr.f32.mxu0 0.0
        %438 = vmatmul.mubr.f32.gmra.mrb[0].mxu0 %v275
        %v439 = vpop.f32.mrb[0].mxu0
        %v440 = vadd.f32 0.0, %v439
        %v441 = vpop.f32.mrb[0].mxu0
        %v442 = vadd.f32 0.0, %v441
        %443 = vmatprep.mubr.f32.mxu0 0.0
        %444 = vmatmul.mubr.f32.gmra.mrb[0].mxu0 %v276
        %v445 = vpop.f32.mrb[0].mxu0
        %v446 = vadd.f32 0.0, %v445
        %v447 = vpop.f32.mrb[0].mxu0
        %v448 = vadd.f32 0.0, %v447
        %449 = vmatprep.mubr.f32.mxu0 0.0
        %450 = vmatmul.mubr.f32.gmra.mrb[0].mxu0 %v277
        %v451 = vpop.f32.mrb[0].mxu0
        %v452 = vadd.f32 0.0, %v451
        %v453 = vpop.f32.mrb[0].mxu0
        %v454 = vadd.f32 0.0, %v453
        %455 = vmatprep.mubr.f32.mxu0 0.0
        %456 = vmatmul.mubr.f32.gmra.mrb[0].mxu0 %v278
        %v457 = vpop.f32.mrb[0].mxu0
        %v458 = vadd.f32 0.0, %v457
        %v459 = vpop.f32.mrb[0].mxu0
        %v460 = vadd.f32 0.0, %v459
        %461 = vmatprep.mubr.f32.mxu0 0.0
        %462 = vmatmul.mubr.f32.gmra.mrb[0].mxu0 %v279
        %v463 = vpop.f32.mrb[0].mxu0
        %v464 = vadd.f32 0.0, %v463
        %v465 = vpop.f32.mrb[0].mxu0
        %v466 = vadd.f32 0.0, %v465
        %467 = vmatprep.mubr.f32.mxu0 0.0
        %468 = vmatmul.mubr.f32.gmra.mrb[0].mxu0 %v280
        %v469 = vpop.f32.mrb[0].mxu0
        %v470 = vadd.f32 0.0, %v469
        %v471 = vpop.f32.mrb[0].mxu0
        %v472 = vadd.f32 0.0, %v471
        %473 = vdwg.mxu0
        %v474 = vld [vmem:[%s257] sm:$0x3]
        %v476 = vlaneseq
        %v477 = vshrl.u32 %v476, 7
        %v478 = vsub.s32 0, %v477
        %v479 = vrot.slane %v474, %v478
        %v480 = vlaneseq
        %v481 = vshrl.u32 %v480, 7
        %v482 = vsub.s32 1, %v481
        %v483 = vrot.slane %v474, %v482
        %v486 = vsub.f32 %v479, %v380
        %v487 = vsub.f32 %v483, %v382
        %v488 = vsub.f32 %v479, %v386
        %v489 = vsub.f32 %v483, %v388
        %v490 = vsub.f32 %v479, %v392
        %v491 = vsub.f32 %v483, %v394
        %v492 = vsub.f32 %v479, %v398
        %v493 = vsub.f32 %v483, %v400
        %v494 = vsub.f32 %v479, %v404
        %v495 = vsub.f32 %v483, %v406
        %v496 = vsub.f32 %v479, %v410
        %v497 = vsub.f32 %v483, %v412
        %v498 = vsub.f32 %v479, %v416
        %v499 = vsub.f32 %v483, %v418
        %v500 = vsub.f32 %v479, %v422
        %v501 = vsub.f32 %v483, %v424
        %v502 = vsub.f32 %v479, %v428
        %v503 = vsub.f32 %v483, %v430
        %v504 = vsub.f32 %v479, %v434
        %v505 = vsub.f32 %v483, %v436
        %v506 = vsub.f32 %v479, %v440
        %v507 = vsub.f32 %v483, %v442
        %v508 = vsub.f32 %v479, %v446
        %v509 = vsub.f32 %v483, %v448
        %v510 = vsub.f32 %v479, %v452
        %v511 = vsub.f32 %v483, %v454
        %v512 = vsub.f32 %v479, %v458
        %v513 = vsub.f32 %v483, %v460
        %v514 = vsub.f32 %v479, %v464
        %v515 = vsub.f32 %v483, %v466
        %v516 = vsub.f32 %v479, %v470
        %v517 = vsub.f32 %v483, %v472
        %v518 = vmin.f32 %v486, %v487
        %519 = vmin.xlane.f32.xlu0 %v518
        %v520 = vpop.xlane.xlu0 %519
        %v521 = vmin.f32 %v488, %v489
        %522 = vmin.xlane.f32.xlu0 %v521
        %v523 = vpop.xlane.xlu0 %522
        %v524 = vmin.f32 %v490, %v491
        %525 = vmin.xlane.f32.xlu0 %v524
        %v526 = vpop.xlane.xlu0 %525
        %v527 = vmin.f32 %v492, %v493
        %528 = vmin.xlane.f32.xlu0 %v527
        %v529 = vpop.xlane.xlu0 %528
        %v530 = vmin.f32 %v494, %v495
        %531 = vmin.xlane.f32.xlu0 %v530
        %v532 = vpop.xlane.xlu0 %531
        %v533 = vmin.f32 %v496, %v497
        %534 = vmin.xlane.f32.xlu0 %v533
        %v535 = vpop.xlane.xlu0 %534
        %v536 = vmin.f32 %v498, %v499
        %537 = vmin.xlane.f32.xlu0 %v536
        %v538 = vpop.xlane.xlu0 %537
        %v539 = vmin.f32 %v500, %v501
        %540 = vmin.xlane.f32.xlu0 %v539
        %v541 = vpop.xlane.xlu0 %540
        %v542 = vmin.f32 %v502, %v503
        %543 = vmin.xlane.f32.xlu0 %v542
        %v544 = vpop.xlane.xlu0 %543
        %v545 = vmin.f32 %v504, %v505
        %546 = vmin.xlane.f32.xlu0 %v545
        %v547 = vpop.xlane.xlu0 %546
        %v548 = vmin.f32 %v506, %v507
        %549 = vmin.xlane.f32.xlu0 %v548
        %v550 = vpop.xlane.xlu0 %549
        %v551 = vmin.f32 %v508, %v509
        %552 = vmin.xlane.f32.xlu0 %v551
        %v553 = vpop.xlane.xlu0 %552
        %v554 = vmin.f32 %v510, %v511
        %555 = vmin.xlane.f32.xlu0 %v554
        %v556 = vpop.xlane.xlu0 %555
        %v557 = vmin.f32 %v512, %v513
        %558 = vmin.xlane.f32.xlu0 %v557
        %v559 = vpop.xlane.xlu0 %558
        %v560 = vmin.f32 %v514, %v515
        %561 = vmin.xlane.f32.xlu0 %v560
        %v562 = vpop.xlane.xlu0 %561
        %v563 = vmin.f32 %v516, %v517
        %564 = vmin.xlane.f32.xlu0 %v563
        %v565 = vpop.xlane.xlu0 %564
        %v566 = vlaneseq
        %v567 = vand.u32 %v566, 127
        %v568 = vadd.s32 %v567, 128
        %vm569 = vcmp.eq.f32.partialorder %v486, %v520
        %vm570 = vcmp.eq.f32.partialorder %v487, %v520
        %vm571 = vcmp.eq.f32.partialorder %v488, %v523
        %vm572 = vcmp.eq.f32.partialorder %v489, %v523
        %vm573 = vcmp.eq.f32.partialorder %v490, %v526
        %vm574 = vcmp.eq.f32.partialorder %v491, %v526
        %vm575 = vcmp.eq.f32.partialorder %v492, %v529
        %vm576 = vcmp.eq.f32.partialorder %v493, %v529
        %vm577 = vcmp.eq.f32.partialorder %v494, %v532
        %vm578 = vcmp.eq.f32.partialorder %v495, %v532
        %vm579 = vcmp.eq.f32.partialorder %v496, %v535
        %vm580 = vcmp.eq.f32.partialorder %v497, %v535
        %vm581 = vcmp.eq.f32.partialorder %v498, %v538
        %vm582 = vcmp.eq.f32.partialorder %v499, %v538
        %vm583 = vcmp.eq.f32.partialorder %v500, %v541
        %vm584 = vcmp.eq.f32.partialorder %v501, %v541
        %vm585 = vcmp.eq.f32.partialorder %v502, %v544
        %vm586 = vcmp.eq.f32.partialorder %v503, %v544
        %vm587 = vcmp.eq.f32.partialorder %v504, %v547
        %vm588 = vcmp.eq.f32.partialorder %v505, %v547
        %vm589 = vcmp.eq.f32.partialorder %v506, %v550
        %vm590 = vcmp.eq.f32.partialorder %v507, %v550
        %vm591 = vcmp.eq.f32.partialorder %v508, %v553
        %vm592 = vcmp.eq.f32.partialorder %v509, %v553
        %vm593 = vcmp.eq.f32.partialorder %v510, %v556
        %vm594 = vcmp.eq.f32.partialorder %v511, %v556
        %vm595 = vcmp.eq.f32.partialorder %v512, %v559
        %vm596 = vcmp.eq.f32.partialorder %v513, %v559
        %vm597 = vcmp.eq.f32.partialorder %v514, %v562
        %vm598 = vcmp.eq.f32.partialorder %v515, %v562
        %vm599 = vcmp.eq.f32.partialorder %v516, %v565
        %vm600 = vcmp.eq.f32.partialorder %v517, %v565
        %v601 = vsel %vm569, %v567, 256
        %v602 = vsel %vm570, %v568, 256
        %v603 = vsel %vm571, %v567, 256
        %v604 = vsel %vm572, %v568, 256
        %v605 = vsel %vm573, %v567, 256
        %v606 = vsel %vm574, %v568, 256
        %v607 = vsel %vm575, %v567, 256
        %v608 = vsel %vm576, %v568, 256
        %v609 = vsel %vm577, %v567, 256
        %v610 = vsel %vm578, %v568, 256
        %v611 = vsel %vm579, %v567, 256
        %v612 = vsel %vm580, %v568, 256
        %v613 = vsel %vm581, %v567, 256
        %v614 = vsel %vm582, %v568, 256
        %v615 = vsel %vm583, %v567, 256
        %v616 = vsel %vm584, %v568, 256
        %v617 = vsel %vm585, %v567, 256
        %v618 = vsel %vm586, %v568, 256
        %v619 = vsel %vm587, %v567, 256
        %v620 = vsel %vm588, %v568, 256
        %v621 = vsel %vm589, %v567, 256
        %v622 = vsel %vm590, %v568, 256
        %v623 = vsel %vm591, %v567, 256
        %v624 = vsel %vm592, %v568, 256
        %v625 = vsel %vm593, %v567, 256
        %v626 = vsel %vm594, %v568, 256
        %v627 = vsel %vm595, %v567, 256
        %v628 = vsel %vm596, %v568, 256
        %v629 = vsel %vm597, %v567, 256
        %v630 = vsel %vm598, %v568, 256
        %v631 = vsel %vm599, %v567, 256
        %v632 = vsel %vm600, %v568, 256
        %vm633 = vcmp.lt.s32.totalorder %v601, %v602
        %v634 = vsel %vm633, %v601, %v602
        %v635 = vand.u32 %v634, 65535
        %v636 = vshra.s32 %v634, 16
        %v637 = vcvt.s32.f32 %v635
        %v638 = vcvt.s32.f32 %v636
        %639 = vmin.xlane.f32.xlu0 %v638
        %v640 = vpop.xlane.xlu0 %639
        %vm641 = vcmp.eq.f32.partialorder %v638, %v640
        %v642 = vsel %vm641, %v637, inf
        %643 = vmin.xlane.f32.xlu0 %v642
        %v644 = vpop.xlane.xlu0 %643
        %v645 = vcvt.f32.s32 %v644
        %v646 = vcvt.f32.s32 %v640
        %v647 = vshll.u32 %v646, 16
        %v648 = vadd.s32 %v647, %v645
        %vm649 = vcmp.lt.s32.totalorder %v603, %v604
        %v650 = vsel %vm649, %v603, %v604
        %v651 = vand.u32 %v650, 65535
        %v652 = vshra.s32 %v650, 16
        %v653 = vcvt.s32.f32 %v651
        %v654 = vcvt.s32.f32 %v652
        %655 = vmin.xlane.f32.xlu0 %v654
        %v656 = vpop.xlane.xlu0 %655
        %vm657 = vcmp.eq.f32.partialorder %v654, %v656
        %v658 = vsel %vm657, %v653, inf
        %659 = vmin.xlane.f32.xlu0 %v658
        %v660 = vpop.xlane.xlu0 %659
        %v661 = vcvt.f32.s32 %v660
        %v662 = vcvt.f32.s32 %v656
        %v663 = vshll.u32 %v662, 16
        %v664 = vadd.s32 %v663, %v661
        %vm665 = vcmp.lt.s32.totalorder %v605, %v606
        %v666 = vsel %vm665, %v605, %v606
        %v667 = vand.u32 %v666, 65535
        %v668 = vshra.s32 %v666, 16
        %v669 = vcvt.s32.f32 %v667
        %v670 = vcvt.s32.f32 %v668
        %671 = vmin.xlane.f32.xlu0 %v670
        %v672 = vpop.xlane.xlu0 %671
        %vm673 = vcmp.eq.f32.partialorder %v670, %v672
        %v674 = vsel %vm673, %v669, inf
        %675 = vmin.xlane.f32.xlu0 %v674
        %v676 = vpop.xlane.xlu0 %675
        %v677 = vcvt.f32.s32 %v676
        %v678 = vcvt.f32.s32 %v672
        %v679 = vshll.u32 %v678, 16
        %v680 = vadd.s32 %v679, %v677
        %vm681 = vcmp.lt.s32.totalorder %v607, %v608
        %v682 = vsel %vm681, %v607, %v608
        %v683 = vand.u32 %v682, 65535
        %v684 = vshra.s32 %v682, 16
        %v685 = vcvt.s32.f32 %v683
        %v686 = vcvt.s32.f32 %v684
        %687 = vmin.xlane.f32.xlu0 %v686
        %v688 = vpop.xlane.xlu0 %687
        %vm689 = vcmp.eq.f32.partialorder %v686, %v688
        %v690 = vsel %vm689, %v685, inf
        %691 = vmin.xlane.f32.xlu0 %v690
        %v692 = vpop.xlane.xlu0 %691
        %v693 = vcvt.f32.s32 %v692
        %v694 = vcvt.f32.s32 %v688
        %v695 = vshll.u32 %v694, 16
        %v696 = vadd.s32 %v695, %v693
        %vm697 = vcmp.lt.s32.totalorder %v609, %v610
        %v698 = vsel %vm697, %v609, %v610
        %v699 = vand.u32 %v698, 65535
        %v700 = vshra.s32 %v698, 16
        %v701 = vcvt.s32.f32 %v699
        %v702 = vcvt.s32.f32 %v700
        %703 = vmin.xlane.f32.xlu0 %v702
        %v704 = vpop.xlane.xlu0 %703
        %vm705 = vcmp.eq.f32.partialorder %v702, %v704
        %v706 = vsel %vm705, %v701, inf
        %707 = vmin.xlane.f32.xlu0 %v706
        %v708 = vpop.xlane.xlu0 %707
        %v709 = vcvt.f32.s32 %v708
        %v710 = vcvt.f32.s32 %v704
        %v711 = vshll.u32 %v710, 16
        %v712 = vadd.s32 %v711, %v709
        %vm713 = vcmp.lt.s32.totalorder %v611, %v612
        %v714 = vsel %vm713, %v611, %v612
        %v715 = vand.u32 %v714, 65535
        %v716 = vshra.s32 %v714, 16
        %v717 = vcvt.s32.f32 %v715
        %v718 = vcvt.s32.f32 %v716
        %719 = vmin.xlane.f32.xlu0 %v718
        %v720 = vpop.xlane.xlu0 %719
        %vm721 = vcmp.eq.f32.partialorder %v718, %v720
        %v722 = vsel %vm721, %v717, inf
        %723 = vmin.xlane.f32.xlu0 %v722
        %v724 = vpop.xlane.xlu0 %723
        %v725 = vcvt.f32.s32 %v724
        %v726 = vcvt.f32.s32 %v720
        %v727 = vshll.u32 %v726, 16
        %v728 = vadd.s32 %v727, %v725
        %vm729 = vcmp.lt.s32.totalorder %v613, %v614
        %v730 = vsel %vm729, %v613, %v614
        %v731 = vand.u32 %v730, 65535
        %v732 = vshra.s32 %v730, 16
        %v733 = vcvt.s32.f32 %v731
        %v734 = vcvt.s32.f32 %v732
        %735 = vmin.xlane.f32.xlu0 %v734
        %v736 = vpop.xlane.xlu0 %735
        %vm737 = vcmp.eq.f32.partialorder %v734, %v736
        %v738 = vsel %vm737, %v733, inf
        %739 = vmin.xlane.f32.xlu0 %v738
        %v740 = vpop.xlane.xlu0 %739
        %v741 = vcvt.f32.s32 %v740
        %v742 = vcvt.f32.s32 %v736
        %v743 = vshll.u32 %v742, 16
        %v744 = vadd.s32 %v743, %v741
        %vm745 = vcmp.lt.s32.totalorder %v615, %v616
        %v746 = vsel %vm745, %v615, %v616
        %v747 = vand.u32 %v746, 65535
        %v748 = vshra.s32 %v746, 16
        %v749 = vcvt.s32.f32 %v747
        %v750 = vcvt.s32.f32 %v748
        %751 = vmin.xlane.f32.xlu0 %v750
        %v752 = vpop.xlane.xlu0 %751
        %vm753 = vcmp.eq.f32.partialorder %v750, %v752
        %v754 = vsel %vm753, %v749, inf
        %755 = vmin.xlane.f32.xlu0 %v754
        %v756 = vpop.xlane.xlu0 %755
        %v757 = vcvt.f32.s32 %v756
        %v758 = vcvt.f32.s32 %v752
        %v759 = vshll.u32 %v758, 16
        %v760 = vadd.s32 %v759, %v757
        %vm761 = vcmp.lt.s32.totalorder %v617, %v618
        %v762 = vsel %vm761, %v617, %v618
        %v763 = vand.u32 %v762, 65535
        %v764 = vshra.s32 %v762, 16
        %v765 = vcvt.s32.f32 %v763
        %v766 = vcvt.s32.f32 %v764
        %767 = vmin.xlane.f32.xlu0 %v766
        %v768 = vpop.xlane.xlu0 %767
        %vm769 = vcmp.eq.f32.partialorder %v766, %v768
        %v770 = vsel %vm769, %v765, inf
        %771 = vmin.xlane.f32.xlu0 %v770
        %v772 = vpop.xlane.xlu0 %771
        %v773 = vcvt.f32.s32 %v772
        %v774 = vcvt.f32.s32 %v768
        %v775 = vshll.u32 %v774, 16
        %v776 = vadd.s32 %v775, %v773
        %vm777 = vcmp.lt.s32.totalorder %v619, %v620
        %v778 = vsel %vm777, %v619, %v620
        %v779 = vand.u32 %v778, 65535
        %v780 = vshra.s32 %v778, 16
        %v781 = vcvt.s32.f32 %v779
        %v782 = vcvt.s32.f32 %v780
        %783 = vmin.xlane.f32.xlu0 %v782
        %v784 = vpop.xlane.xlu0 %783
        %vm785 = vcmp.eq.f32.partialorder %v782, %v784
        %v786 = vsel %vm785, %v781, inf
        %787 = vmin.xlane.f32.xlu0 %v786
        %v788 = vpop.xlane.xlu0 %787
        %v789 = vcvt.f32.s32 %v788
        %v790 = vcvt.f32.s32 %v784
        %v791 = vshll.u32 %v790, 16
        %v792 = vadd.s32 %v791, %v789
        %vm793 = vcmp.lt.s32.totalorder %v621, %v622
        %v794 = vsel %vm793, %v621, %v622
        %v795 = vand.u32 %v794, 65535
        %v796 = vshra.s32 %v794, 16
        %v797 = vcvt.s32.f32 %v795
        %v798 = vcvt.s32.f32 %v796
        %799 = vmin.xlane.f32.xlu0 %v798
        %v800 = vpop.xlane.xlu0 %799
        %vm801 = vcmp.eq.f32.partialorder %v798, %v800
        %v802 = vsel %vm801, %v797, inf
        %803 = vmin.xlane.f32.xlu0 %v802
        %v804 = vpop.xlane.xlu0 %803
        %v805 = vcvt.f32.s32 %v804
        %v806 = vcvt.f32.s32 %v800
        %v807 = vshll.u32 %v806, 16
        %v808 = vadd.s32 %v807, %v805
        %vm809 = vcmp.lt.s32.totalorder %v623, %v624
        %v810 = vsel %vm809, %v623, %v624
        %v811 = vand.u32 %v810, 65535
        %v812 = vshra.s32 %v810, 16
        %v813 = vcvt.s32.f32 %v811
        %v814 = vcvt.s32.f32 %v812
        %815 = vmin.xlane.f32.xlu0 %v814
        %v816 = vpop.xlane.xlu0 %815
        %vm817 = vcmp.eq.f32.partialorder %v814, %v816
        %v818 = vsel %vm817, %v813, inf
        %819 = vmin.xlane.f32.xlu0 %v818
        %v820 = vpop.xlane.xlu0 %819
        %v821 = vcvt.f32.s32 %v820
        %v822 = vcvt.f32.s32 %v816
        %v823 = vshll.u32 %v822, 16
        %v824 = vadd.s32 %v823, %v821
        %vm825 = vcmp.lt.s32.totalorder %v625, %v626
        %v826 = vsel %vm825, %v625, %v626
        %v827 = vand.u32 %v826, 65535
        %v828 = vshra.s32 %v826, 16
        %v829 = vcvt.s32.f32 %v827
        %v830 = vcvt.s32.f32 %v828
        %831 = vmin.xlane.f32.xlu0 %v830
        %v832 = vpop.xlane.xlu0 %831
        %vm833 = vcmp.eq.f32.partialorder %v830, %v832
        %v834 = vsel %vm833, %v829, inf
        %835 = vmin.xlane.f32.xlu0 %v834
        %v836 = vpop.xlane.xlu0 %835
        %v837 = vcvt.f32.s32 %v836
        %v838 = vcvt.f32.s32 %v832
        %v839 = vshll.u32 %v838, 16
        %v840 = vadd.s32 %v839, %v837
        %vm841 = vcmp.lt.s32.totalorder %v627, %v628
        %v842 = vsel %vm841, %v627, %v628
        %v843 = vand.u32 %v842, 65535
        %v844 = vshra.s32 %v842, 16
        %v845 = vcvt.s32.f32 %v843
        %v846 = vcvt.s32.f32 %v844
        %847 = vmin.xlane.f32.xlu0 %v846
        %v848 = vpop.xlane.xlu0 %847
        %vm849 = vcmp.eq.f32.partialorder %v846, %v848
        %v850 = vsel %vm849, %v845, inf
        %851 = vmin.xlane.f32.xlu0 %v850
        %v852 = vpop.xlane.xlu0 %851
        %v853 = vcvt.f32.s32 %v852
        %v854 = vcvt.f32.s32 %v848
        %v855 = vshll.u32 %v854, 16
        %v856 = vadd.s32 %v855, %v853
        %vm857 = vcmp.lt.s32.totalorder %v629, %v630
        %v858 = vsel %vm857, %v629, %v630
        %v859 = vand.u32 %v858, 65535
        %v860 = vshra.s32 %v858, 16
        %v861 = vcvt.s32.f32 %v859
        %v862 = vcvt.s32.f32 %v860
        %863 = vmin.xlane.f32.xlu0 %v862
        %v864 = vpop.xlane.xlu0 %863
        %vm865 = vcmp.eq.f32.partialorder %v862, %v864
        %v866 = vsel %vm865, %v861, inf
        %867 = vmin.xlane.f32.xlu0 %v866
        %v868 = vpop.xlane.xlu0 %867
        %v869 = vcvt.f32.s32 %v868
        %v870 = vcvt.f32.s32 %v864
        %v871 = vshll.u32 %v870, 16
        %v872 = vadd.s32 %v871, %v869
        %vm873 = vcmp.lt.s32.totalorder %v631, %v632
        %v874 = vsel %vm873, %v631, %v632
        %v875 = vand.u32 %v874, 65535
        %v876 = vshra.s32 %v874, 16
        %v877 = vcvt.s32.f32 %v875
        %v878 = vcvt.s32.f32 %v876
        %879 = vmin.xlane.f32.xlu0 %v878
        %v880 = vpop.xlane.xlu0 %879
        %vm881 = vcmp.eq.f32.partialorder %v878, %v880
        %v882 = vsel %vm881, %v877, inf
        %883 = vmin.xlane.f32.xlu0 %v882
        %v884 = vpop.xlane.xlu0 %883
        %v885 = vcvt.f32.s32 %v884
        %v886 = vcvt.f32.s32 %v880
        %v887 = vshll.u32 %v886, 16
        %v888 = vadd.s32 %v887, %v885
        %s889 = smul.u32 %s25, 256
        %v890 = vstv %s889
        %v891 = vadd.s32 %v648, %v890
        %v892 = vadd.s32 %v664, %v890
        %v893 = vadd.s32 %v680, %v890
        %v894 = vadd.s32 %v696, %v890
        %v895 = vadd.s32 %v712, %v890
        %v896 = vadd.s32 %v728, %v890
        %v897 = vadd.s32 %v744, %v890
        %v898 = vadd.s32 %v760, %v890
        %v899 = vadd.s32 %v776, %v890
        %v900 = vadd.s32 %v792, %v890
        %v901 = vadd.s32 %v808, %v890
        %v902 = vadd.s32 %v824, %v890
        %v903 = vadd.s32 %v840, %v890
        %v904 = vadd.s32 %v856, %v890
        %v905 = vadd.s32 %v872, %v890
        %v906 = vadd.s32 %v888, %v890
        %p907 = scmp.eq.s32.totalorder %s25, 0
        // Predicated region
        $region41: #{tpu_custom_call.1} parent=31 // pred_check
          %p908 = pneg %p907
        $region42: #{tpu_custom_call.1} parent=31 // pred_check_branch
          %910 = sbr.rel (%p908) target = $region44
        $region43: #{tpu_custom_call.1} parent=31 // pred_region
          %vm911 = vcmask 7168
          %912 = vst.msk [vmem:[#allocation2] sm:$0xff] %vm911, %v520
          %913 = vst.msk [vmem:[#allocation2 + $0x8] sm:$0xff] %vm911, %v523
          %914 = vst.msk [vmem:[#allocation2 + $0x10] sm:$0xff] %vm911, %v526
          %915 = vst.msk [vmem:[#allocation2 + $0x18] sm:$0xff] %vm911, %v529
          %916 = vst.msk [vmem:[#allocation2 + $0x20] sm:$0xff] %vm911, %v532
          %917 = vst.msk [vmem:[#allocation2 + $0x28] sm:$0xff] %vm911, %v535
          %918 = vst.msk [vmem:[#allocation2 + $0x30] sm:$0xff] %vm911, %v538
          %919 = vst.msk [vmem:[#allocation2 + $0x38] sm:$0xff] %vm911, %v541
          %920 = vst.msk [vmem:[#allocation2 + $0x40] sm:$0xff] %vm911, %v544
          %921 = vst.msk [vmem:[#allocation2 + $0x48] sm:$0xff] %vm911, %v547
          %922 = vst.msk [vmem:[#allocation2 + $0x50] sm:$0xff] %vm911, %v550
          %923 = vst.msk [vmem:[#allocation2 + $0x58] sm:$0xff] %vm911, %v553
          %924 = vst.msk [vmem:[#allocation2 + $0x60] sm:$0xff] %vm911, %v556
          %925 = vst.msk [vmem:[#allocation2 + $0x68] sm:$0xff] %vm911, %v559
          %926 = vst.msk [vmem:[#allocation2 + $0x70] sm:$0xff] %vm911, %v562
          %927 = vst.msk [vmem:[#allocation2 + $0x78] sm:$0xff] %vm911, %v565
          %928 = vst.msk [vmem:[#allocation3] sm:$0xff] %vm911, %v891
          %929 = vst.msk [vmem:[#allocation3 + $0x8] sm:$0xff] %vm911, %v892
          %930 = vst.msk [vmem:[#allocation3 + $0x10] sm:$0xff] %vm911, %v893
          %931 = vst.msk [vmem:[#allocation3 + $0x18] sm:$0xff] %vm911, %v894
          %932 = vst.msk [vmem:[#allocation3 + $0x20] sm:$0xff] %vm911, %v895
          %933 = vst.msk [vmem:[#allocation3 + $0x28] sm:$0xff] %vm911, %v896
          %934 = vst.msk [vmem:[#allocation3 + $0x30] sm:$0xff] %vm911, %v897
          %935 = vst.msk [vmem:[#allocation3 + $0x38] sm:$0xff] %vm911, %v898
          %936 = vst.msk [vmem:[#allocation3 + $0x40] sm:$0xff] %vm911, %v899
          %937 = vst.msk [vmem:[#allocation3 + $0x48] sm:$0xff] %vm911, %v900
          %938 = vst.msk [vmem:[#allocation3 + $0x50] sm:$0xff] %vm911, %v901
          %939 = vst.msk [vmem:[#allocation3 + $0x58] sm:$0xff] %vm911, %v902
          %940 = vst.msk [vmem:[#allocation3 + $0x60] sm:$0xff] %vm911, %v903
          %941 = vst.msk [vmem:[#allocation3 + $0x68] sm:$0xff] %vm911, %v904
          %942 = vst.msk [vmem:[#allocation3 + $0x70] sm:$0xff] %vm911, %v905
          %943 = vst.msk [vmem:[#allocation3 + $0x78] sm:$0xff] %vm911, %v906
        $region44: #{tpu_custom_call.1} parent=31 // pred_fallthru
          _
        %p944 = scmp.gt.s32.totalorder %s25, 0
        // Predicated region
        $region45: #{tpu_custom_call.1} parent=31 // pred_check
          %p945 = pneg %p944
        $region46: #{tpu_custom_call.1} parent=31 // pred_check_branch
          %947 = sbr.rel (%p945) target = $region48
        $region47: #{tpu_custom_call.1} parent=31 // pred_region
          %v948 = vld [vmem:[#allocation2] sm:$0xff]
          %v949 = vld [vmem:[#allocation2 + $0x8] sm:$0xff]
          %v950 = vld [vmem:[#allocation2 + $0x10] sm:$0xff]
          %v951 = vld [vmem:[#allocation2 + $0x18] sm:$0xff]
          %v952 = vld [vmem:[#allocation2 + $0x20] sm:$0xff]
          %v953 = vld [vmem:[#allocation2 + $0x28] sm:$0xff]
          %v954 = vld [vmem:[#allocation2 + $0x30] sm:$0xff]
          %v955 = vld [vmem:[#allocation2 + $0x38] sm:$0xff]
          %v956 = vld [vmem:[#allocation2 + $0x40] sm:$0xff]
          %v957 = vld [vmem:[#allocation2 + $0x48] sm:$0xff]
          %v958 = vld [vmem:[#allocation2 + $0x50] sm:$0xff]
          %v959 = vld [vmem:[#allocation2 + $0x58] sm:$0xff]
          %v960 = vld [vmem:[#allocation2 + $0x60] sm:$0xff]
          %v961 = vld [vmem:[#allocation2 + $0x68] sm:$0xff]
          %v962 = vld [vmem:[#allocation2 + $0x70] sm:$0xff]
          %v963 = vld [vmem:[#allocation2 + $0x78] sm:$0xff]
          %vm964 = vcmp.lt.f32.partialorder %v520, %v948
          %vm965 = vcmp.lt.f32.partialorder %v523, %v949
          %vm966 = vcmp.lt.f32.partialorder %v526, %v950
          %vm967 = vcmp.lt.f32.partialorder %v529, %v951
          %vm968 = vcmp.lt.f32.partialorder %v532, %v952
          %vm969 = vcmp.lt.f32.partialorder %v535, %v953
          %vm970 = vcmp.lt.f32.partialorder %v538, %v954
          %vm971 = vcmp.lt.f32.partialorder %v541, %v955
          %vm972 = vcmp.lt.f32.partialorder %v544, %v956
          %vm973 = vcmp.lt.f32.partialorder %v547, %v957
          %vm974 = vcmp.lt.f32.partialorder %v550, %v958
          %vm975 = vcmp.lt.f32.partialorder %v553, %v959
          %vm976 = vcmp.lt.f32.partialorder %v556, %v960
          %vm977 = vcmp.lt.f32.partialorder %v559, %v961
          %vm978 = vcmp.lt.f32.partialorder %v562, %v962
          %vm979 = vcmp.lt.f32.partialorder %v565, %v963
          %v980 = vsel %vm964, %v520, %v948
          %v981 = vsel %vm965, %v523, %v949
          %v982 = vsel %vm966, %v526, %v950
          %v983 = vsel %vm967, %v529, %v951
          %v984 = vsel %vm968, %v532, %v952
          %v985 = vsel %vm969, %v535, %v953
          %v986 = vsel %vm970, %v538, %v954
          %v987 = vsel %vm971, %v541, %v955
          %v988 = vsel %vm972, %v544, %v956
          %v989 = vsel %vm973, %v547, %v957
          %v990 = vsel %vm974, %v550, %v958
          %v991 = vsel %vm975, %v553, %v959
          %v992 = vsel %vm976, %v556, %v960
          %v993 = vsel %vm977, %v559, %v961
          %v994 = vsel %vm978, %v562, %v962
          %v995 = vsel %vm979, %v565, %v963
          %vm996 = vcmask 7168
          %997 = vst.msk [vmem:[#allocation2] sm:$0xff] %vm996, %v980
          %998 = vst.msk [vmem:[#allocation2 + $0x8] sm:$0xff] %vm996, %v981
          %999 = vst.msk [vmem:[#allocation2 + $0x10] sm:$0xff] %vm996, %v982
          %1000 = vst.msk [vmem:[#allocation2 + $0x18] sm:$0xff] %vm996, %v983
          %1001 = vst.msk [vmem:[#allocation2 + $0x20] sm:$0xff] %vm996, %v984
          %1002 = vst.msk [vmem:[#allocation2 + $0x28] sm:$0xff] %vm996, %v985
          %1003 = vst.msk [vmem:[#allocation2 + $0x30] sm:$0xff] %vm996, %v986
          %1004 = vst.msk [vmem:[#allocation2 + $0x38] sm:$0xff] %vm996, %v987
          %1005 = vst.msk [vmem:[#allocation2 + $0x40] sm:$0xff] %vm996, %v988
          %1006 = vst.msk [vmem:[#allocation2 + $0x48] sm:$0xff] %vm996, %v989
          %1007 = vst.msk [vmem:[#allocation2 + $0x50] sm:$0xff] %vm996, %v990
          %1008 = vst.msk [vmem:[#allocation2 + $0x58] sm:$0xff] %vm996, %v991
          %1009 = vst.msk [vmem:[#allocation2 + $0x60] sm:$0xff] %vm996, %v992
          %1010 = vst.msk [vmem:[#allocation2 + $0x68] sm:$0xff] %vm996, %v993
          %1011 = vst.msk [vmem:[#allocation2 + $0x70] sm:$0xff] %vm996, %v994
          %1012 = vst.msk [vmem:[#allocation2 + $0x78] sm:$0xff] %vm996, %v995
          %v1013 = vld [vmem:[#allocation3] sm:$0xff]
          %v1014 = vld [vmem:[#allocation3 + $0x8] sm:$0xff]
          %v1015 = vld [vmem:[#allocation3 + $0x10] sm:$0xff]
          %v1016 = vld [vmem:[#allocation3 + $0x18] sm:$0xff]
          %v1017 = vld [vmem:[#allocation3 + $0x20] sm:$0xff]
          %v1018 = vld [vmem:[#allocation3 + $0x28] sm:$0xff]
          %v1019 = vld [vmem:[#allocation3 + $0x30] sm:$0xff]
          %v1020 = vld [vmem:[#allocation3 + $0x38] sm:$0xff]
          %v1021 = vld [vmem:[#allocation3 + $0x40] sm:$0xff]
          %v1022 = vld [vmem:[#allocation3 + $0x48] sm:$0xff]
          %v1023 = vld [vmem:[#allocation3 + $0x50] sm:$0xff]
          %v1024 = vld [vmem:[#allocation3 + $0x58] sm:$0xff]
          %v1025 = vld [vmem:[#allocation3 + $0x60] sm:$0xff]
          %v1026 = vld [vmem:[#allocation3 + $0x68] sm:$0xff]
          %v1027 = vld [vmem:[#allocation3 + $0x70] sm:$0xff]
          %v1028 = vld [vmem:[#allocation3 + $0x78] sm:$0xff]
          %v1029 = vsel %vm964, %v891, %v1013
          %v1030 = vsel %vm965, %v892, %v1014
          %v1031 = vsel %vm966, %v893, %v1015
          %v1032 = vsel %vm967, %v894, %v1016
          %v1033 = vsel %vm968, %v895, %v1017
          %v1034 = vsel %vm969, %v896, %v1018
          %v1035 = vsel %vm970, %v897, %v1019
          %v1036 = vsel %vm971, %v898, %v1020
          %v1037 = vsel %vm972, %v899, %v1021
          %v1038 = vsel %vm973, %v900, %v1022
          %v1039 = vsel %vm974, %v901, %v1023
          %v1040 = vsel %vm975, %v902, %v1024
          %v1041 = vsel %vm976, %v903, %v1025
          %v1042 = vsel %vm977, %v904, %v1026
          %v1043 = vsel %vm978, %v905, %v1027
          %v1044 = vsel %vm979, %v906, %v1028
          %1045 = vst.msk [vmem:[#allocation3] sm:$0xff] %vm996, %v1029
          %1046 = vst.msk [vmem:[#allocation3 + $0x8] sm:$0xff] %vm996, %v1030
          %1047 = vst.msk [vmem:[#allocation3 + $0x10] sm:$0xff] %vm996, %v1031
          %1048 = vst.msk [vmem:[#allocation3 + $0x18] sm:$0xff] %vm996, %v1032
          %1049 = vst.msk [vmem:[#allocation3 + $0x20] sm:$0xff] %vm996, %v1033
          %1050 = vst.msk [vmem:[#allocation3 + $0x28] sm:$0xff] %vm996, %v1034
          %1051 = vst.msk [vmem:[#allocation3 + $0x30] sm:$0xff] %vm996, %v1035
          %1052 = vst.msk [vmem:[#allocation3 + $0x38] sm:$0xff] %vm996, %v1036
          %1053 = vst.msk [vmem:[#allocation3 + $0x40] sm:$0xff] %vm996, %v1037
          %1054 = vst.msk [vmem:[#allocation3 + $0x48] sm:$0xff] %vm996, %v1038
          %1055 = vst.msk [vmem:[#allocation3 + $0x50] sm:$0xff] %vm996, %v1039
          %1056 = vst.msk [vmem:[#allocation3 + $0x58] sm:$0xff] %vm996, %v1040
          %1057 = vst.msk [vmem:[#allocation3 + $0x60] sm:$0xff] %vm996, %v1041
          %1058 = vst.msk [vmem:[#allocation3 + $0x68] sm:$0xff] %vm996, %v1042
          %1059 = vst.msk [vmem:[#allocation3 + $0x70] sm:$0xff] %vm996, %v1043
          %1060 = vst.msk [vmem:[#allocation3 + $0x78] sm:$0xff] %vm996, %v1044
        $region48: #{tpu_custom_call.1} parent=31 // pred_fallthru
          _
        %p1061 = scmp.eq.s32.totalorder %s25, 1
        // Predicated region
        $region49: #{tpu_custom_call.1} parent=31 // pred_check
          %p1062 = pneg %p1061
        $region50: #{tpu_custom_call.1} parent=31 // pred_check_branch
          %1064 = sbr.rel (%p1062) target = $region52
        $region51: #{tpu_custom_call.1} parent=31 // pred_region
          %v1065 = vld [vmem:[#allocation3] sm:$0xff]
          %v1066 = vld [vmem:[#allocation3 + $0x8] sm:$0xff]
          %v1067 = vld [vmem:[#allocation3 + $0x10] sm:$0xff]
          %v1068 = vld [vmem:[#allocation3 + $0x18] sm:$0xff]
          %v1069 = vld [vmem:[#allocation3 + $0x20] sm:$0xff]
          %v1070 = vld [vmem:[#allocation3 + $0x28] sm:$0xff]
          %v1071 = vld [vmem:[#allocation3 + $0x30] sm:$0xff]
          %v1072 = vld [vmem:[#allocation3 + $0x38] sm:$0xff]
          %v1073 = vld [vmem:[#allocation3 + $0x40] sm:$0xff]
          %v1074 = vld [vmem:[#allocation3 + $0x48] sm:$0xff]
          %v1075 = vld [vmem:[#allocation3 + $0x50] sm:$0xff]
          %v1076 = vld [vmem:[#allocation3 + $0x58] sm:$0xff]
          %v1077 = vld [vmem:[#allocation3 + $0x60] sm:$0xff]
          %v1078 = vld [vmem:[#allocation3 + $0x68] sm:$0xff]
          %v1079 = vld [vmem:[#allocation3 + $0x70] sm:$0xff]
          %v1080 = vld [vmem:[#allocation3 + $0x78] sm:$0xff]
          %vm1081 = vcmask 7168
          %1082 = vst.msk [vmem:[%s263] sm:$0xff] %vm1081, %v1065
          %1083 = vst.msk [vmem:[%s263 + $0x8] sm:$0xff] %vm1081, %v1066
          %1084 = vst.msk [vmem:[%s263 + $0x10] sm:$0xff] %vm1081, %v1067
          %1085 = vst.msk [vmem:[%s263 + $0x18] sm:$0xff] %vm1081, %v1068
          %1086 = vst.msk [vmem:[%s263 + $0x20] sm:$0xff] %vm1081, %v1069
          %1087 = vst.msk [vmem:[%s263 + $0x28] sm:$0xff] %vm1081, %v1070
          %1088 = vst.msk [vmem:[%s263 + $0x30] sm:$0xff] %vm1081, %v1071
          %1089 = vst.msk [vmem:[%s263 + $0x38] sm:$0xff] %vm1081, %v1072
          %1090 = vst.msk [vmem:[%s263 + $0x40] sm:$0xff] %vm1081, %v1073
          %1091 = vst.msk [vmem:[%s263 + $0x48] sm:$0xff] %vm1081, %v1074
          %1092 = vst.msk [vmem:[%s263 + $0x50] sm:$0xff] %vm1081, %v1075
          %1093 = vst.msk [vmem:[%s263 + $0x58] sm:$0xff] %vm1081, %v1076
          %1094 = vst.msk [vmem:[%s263 + $0x60] sm:$0xff] %vm1081, %v1077
          %1095 = vst.msk [vmem:[%s263 + $0x68] sm:$0xff] %vm1081, %v1078
          %1096 = vst.msk [vmem:[%s263 + $0x70] sm:$0xff] %vm1081, %v1079
          %1097 = vst.msk [vmem:[%s263 + $0x78] sm:$0xff] %vm1081, %v1080
        $region52: #{tpu_custom_call.1} parent=31 // pred_fallthru
          _
        %s1098 = smul.u32 16, %s24
        %p1099 = scmp.lt.s32.totalorder %s1098, 31
        %s1100 = scalar_select %p1099, %s1098, 31
        %s1101 = smul.addr %s1100, 8
        %s1102 = scalar_lea.vmem %s3, %s1101
        // Predicated region
        $region53: #{tpu_custom_call.1} parent=31 // pred_check
          %p1103 = pneg %p128
        $region54: #{tpu_custom_call.1} parent=31 // pred_check_branch
          %1105 = sbr.rel (%p1103) target = $region56
        $region55: #{tpu_custom_call.1} parent=31 // pred_region
          %s1106 = smul.u32 16, %s24
        $region56: #{tpu_custom_call.1} parent=31 // pred_fallthru
          _
      $region32: #{tpu_custom_call.1} parent=5 // pred_fallthru
        _
      %p1107 = scmp.le.s32.totalorder 2, %s15
      // Predicated region
      $region57: #{tpu_custom_call.1} parent=5 // pred_check
        %p1108 = pneg %p1107
      $region58: #{tpu_custom_call.1} parent=5 // pred_check_branch
        %1110 = sbr.rel (%p1108) target = $region60
      $region59: #{tpu_custom_call.1} parent=5 // pred_region
        %s1111 = ssub.s32 %s15, 2
        // Predicated region
        $region61: #{tpu_custom_call.1} parent=59 // pred_check
          %p1112 = pneg %p134
        $region62: #{tpu_custom_call.1} parent=59 // pred_check_branch
          %1114 = sbr.rel (%p1112) target = $region64
        $region63: #{tpu_custom_call.1} parent=59 // pred_region
          %s1115 = smul.u32 16, %s26
          %p1116 = scmp.lt.s32.totalorder %s1115, 31
          %s1117 = scalar_select %p1116, %s1115, 31
          %s1118 = smul.addr %s1117, 8
          %s1119 = scalar_lea.vmem %s3, %s1118
        $region64: #{tpu_custom_call.1} parent=59 // pred_fallthru
          _
      $region60: #{tpu_custom_call.1} parent=5 // pred_fallthru
        _
    $region6: #{tpu_custom_call.1} parent=1 // loop_footer
      %s19 = sadd.s32 1, %s15
    $region7: #{tpu_custom_call.1} parent=1 // loop_footer_branch
      %14 = sbr.rel target = $region3
    $region8: #{tpu_custom_call.1} parent=1 // loop_exit
      _
    %1120 = vsyncpa [#allocation5], 1
    %s1121 = scalar_lea.sflag [#allocation5], 1
    %1122 = vsyncpa %s1121, 1
    %1123 = vsyncpa [#allocation7], 1
    %s1124 = scalar_lea.sflag [#allocation7], 1
    %1125 = vsyncpa %s1124, 1

</llo_original>
